<compile_context>
chip_gen: v7x
topology: tpu7x:2x2x1
jax: 0.10.0
libtpu: 0.0.40
codegen_flags: <defaults>
</compile_context>

<pallas_src>
import math

import numpy as np
import jax
import jax.numpy as jnp
from jax.experimental import pallas as pl
from jax.experimental.pallas import tpu as pltpu


def _sine_pos_enc_kernel(inv_ref, phase_ref, y_ref, x_ref, out_ref):
    """One (batch, feature-tile) grid step.

    inv_ref   : VMEM (tile_feats, 1) f32 — 1/dim_t per output channel
    phase_ref : VMEM (tile_feats, 1) f32 — 0.0 (even -> sin) or pi/2 (odd -> cos)
    y_ref     : VMEM (1, 1, HW) f32 — normalized y_embed, spatially flat
    x_ref     : VMEM (1, 1, HW) f32 — normalized x_embed, spatially flat
    out_ref   : VMEM (1, 2, tile_feats, HW) f32; [:, 0]=pos_y, [:, 1]=pos_x
    """
    inv = inv_ref[...]              # (tile_feats, 1)
    ph = phase_ref[...]             # (tile_feats, 1)
    y = y_ref[0]                    # (1, HW)
    x = x_ref[0]                    # (1, HW)
    # One lane-dense EUP slab per embed (sin(t + pi/2) == cos(t)); the stores
    # are full-block, unmasked vst.
    out_ref[0, 0] = jnp.sin(y * inv + ph)
    out_ref[0, 1] = jnp.sin(x * inv + ph)


def _pick_tile_feats(num_feats, hw, max_block_bytes=8 << 20):
    """Full num_feats if the (2, tile, HW) f32 output block fits the budget,
    else the largest multiple-of-8 divisor that does (keeps the
    double-buffered block well inside v7x's 64 MiB VMEM while still giving
    v5e/v6e big writeback DMAs)."""
    def block_bytes(t):
        return 2 * t * hw * 4
    if num_feats <= 8 or block_bytes(num_feats) <= max_block_bytes:
        return num_feats
    best = None
    t = 8
    while t < num_feats:
        if num_feats % t == 0 and block_bytes(t) <= max_block_bytes:
            best = t
        t += 8
    return best if best is not None else num_feats


def sine_positional_encoding(mask, *, num_feats, temperature=10000.0,
                             normalize=True, scale=2.0 * math.pi,
                             offset=0.0, eps=1e-6):
    """Pallas implementation of SinePositionalEncodingWraper.forward."""
    assert num_feats % 2 == 0, "num_feats must be even (sin/cos pairs)"
    B, H, W = mask.shape
    HW = H * W
    C = 2 * num_feats

    # ---- cheap prologue in plain JAX (cumsums + normalization), hoisted out
    # of the per-feature-tile recompute; hands the kernel flat lane-dense
    # embeds so no in-kernel (H,W)->(H*W) relayout is needed.
    not_mask = (1 - mask.astype(jnp.int32)).astype(jnp.float32)
    y_embed = jnp.cumsum(not_mask, axis=1)
    x_embed = jnp.cumsum(not_mask, axis=2)
    if normalize:
        y_embed = (y_embed + offset) / (y_embed[:, -1:, :] + eps) * scale
        x_embed = (x_embed + offset) / (x_embed[:, :, -1:] + eps) * scale
    y_flat = y_embed.reshape(B, 1, HW)
    x_flat = x_embed.reshape(B, 1, HW)

    # Per-channel 1/dim_t (dim_t[2k] == dim_t[2k+1]) and the sin/cos phase.
    c = jnp.arange(num_feats, dtype=jnp.float32)
    dim_t = jnp.asarray(temperature, jnp.float32) ** (
        2.0 * jnp.floor(c / 2.0) / float(num_feats))
    inv_dim = (1.0 / dim_t).reshape(num_feats, 1)
    phase = jnp.where((jnp.arange(num_feats) % 2) == 1,
                      jnp.float32(math.pi / 2.0),
                      jnp.float32(0.0)).reshape(num_feats, 1)

    tile_feats = _pick_tile_feats(num_feats, HW)
    n_feat_tiles = num_feats // tile_feats

    out = pl.pallas_call(
        _sine_pos_enc_kernel,
        out_shape=jax.ShapeDtypeStruct((B, 2, num_feats, HW), jnp.float32),
        grid=(B, n_feat_tiles),
        in_specs=[
            pl.BlockSpec((tile_feats, 1), lambda b, f: (f, 0)),   # inv_dim
            pl.BlockSpec((tile_feats, 1), lambda b, f: (f, 0)),   # phase
            pl.BlockSpec((1, 1, HW), lambda b, f: (b, 0, 0)),     # y_flat
            pl.BlockSpec((1, 1, HW), lambda b, f: (b, 0, 0)),     # x_flat
        ],
        out_specs=pl.BlockSpec((1, 2, tile_feats, HW),
                               lambda b, f: (b, 0, f, 0)),
        compiler_params=pltpu.CompilerParams(
            dimension_semantics=("parallel", "parallel"),
            vmem_limit_bytes=32 * 1024 * 1024),
    )(inv_dim, phase, y_flat, x_flat)

    # (B, 2, num_feats, HW) -> (B, 2*num_feats, H, W): contiguous,
    # metadata-only reshape realizing cat((pos_y, pos_x), channel).
    return out.reshape(B, C, H, W)


def _reference(mask, *, num_feats, temperature, normalize, scale, offset, eps):
    """Pure-JAX transcription of the PyTorch forward for verification."""
    mask = mask.astype(jnp.int32)
    not_mask = 1 - mask
    y_embed = jnp.cumsum(not_mask, axis=1).astype(jnp.float32)
    x_embed = jnp.cumsum(not_mask, axis=2).astype(jnp.float32)
    if normalize:
        y_embed = (y_embed + offset) / (y_embed[:, -1:, :] + eps) * scale
        x_embed = (x_embed + offset) / (x_embed[:, :, -1:] + eps) * scale
    dim_t = jnp.arange(num_feats, dtype=jnp.float32)
    dim_t = temperature ** (2.0 * jnp.floor(dim_t / 2.0) / num_feats)
    pos_x = x_embed[..., None] / dim_t
    pos_y = y_embed[..., None] / dim_t
    B, H, W = mask.shape
    pos_x = jnp.stack((jnp.sin(pos_x[..., 0::2]), jnp.cos(pos_x[..., 1::2])),
                      axis=4).reshape(B, H, W, num_feats)
    pos_y = jnp.stack((jnp.sin(pos_y[..., 0::2]), jnp.cos(pos_y[..., 1::2])),
                      axis=4).reshape(B, H, W, num_feats)
    pos = jnp.concatenate((pos_y, pos_x), axis=3).transpose(0, 3, 1, 2)
    return pos


if __name__ == "__main__":
    # Typical DETR config shrunk to small synthetic sizes.
    num_feats = 8
    temperature = 10000.0
    normalize = True
    scale = 2.0 * math.pi
    offset = 0.0
    eps = 1e-6

    B, H, W = 2, 16, 16
    key = jax.random.PRNGKey(0)
    mask = jax.random.bernoulli(key, p=0.3, shape=(B, H, W)).astype(jnp.int32)

    pos = sine_positional_encoding(
        mask, num_feats=num_feats, temperature=temperature,
        normalize=normalize, scale=scale, offset=offset, eps=eps)
    pos = jax.block_until_ready(pos)

    ref = _reference(mask, num_feats=num_feats, temperature=temperature,
                     normalize=normalize, scale=scale, offset=offset, eps=eps)
    np.testing.assert_allclose(np.asarray(pos), np.asarray(ref),
                               rtol=1e-5, atol=1e-5)
    assert pos.shape == (B, 2 * num_feats, H, W)
    assert pos.dtype == jnp.float32

    print("KERNEL_OK")
</pallas_src>

<mosaic_0001>
module attributes {stable_mosaic.version = 11 : i64} {
  func.func @_sine_pos_enc_kernel(%arg0: i32, %arg1: i32, %arg2: memref<8x1xf32, #tpu.memory_space<vmem>>, %arg3: memref<8x1xf32, #tpu.memory_space<vmem>>, %arg4: memref<1x1x256xf32, #tpu.memory_space<vmem>>, %arg5: memref<1x1x256xf32, #tpu.memory_space<vmem>>, %arg6: memref<1x2x8x256xf32, #tpu.memory_space<vmem>>) attributes {dimension_semantics = [#tpu.dimension_semantics<parallel>, #tpu.dimension_semantics<parallel>], iteration_bounds = array<i64: 2, 1>, scalar_prefetch = 0 : i64, scratch_operands = 0 : i64, tpu.core_type = #tpu.core_type<tc>, window_params = [{transform_indices = @transform_0, window_bounds = array<i64: 8, 1>}, {transform_indices = @transform_1, window_bounds = array<i64: 8, 1>}, {transform_indices = @transform_2, window_bounds = array<i64: 1, 1, 256>}, {transform_indices = @transform_3, window_bounds = array<i64: 1, 1, 256>}, {transform_indices = @transform_4, window_bounds = array<i64: 1, 2, 8, 256>}]} {
    %c0 = arith.constant 0 : index
    %c0_0 = arith.constant 0 : index
    %0 = vector.load %arg2[%c0, %c0_0] : memref<8x1xf32, #tpu.memory_space<vmem>>, vector<8x1xf32>
    %c0_1 = arith.constant 0 : index
    %c0_2 = arith.constant 0 : index
    %1 = vector.load %arg3[%c0_1, %c0_2] : memref<8x1xf32, #tpu.memory_space<vmem>>, vector<8x1xf32>
    %c0_3 = arith.constant 0 : index
    %c0_4 = arith.constant 0 : index
    %c0_5 = arith.constant 0 : index
    %2 = vector.load %arg4[%c0_3, %c0_4, %c0_5] : memref<1x1x256xf32, #tpu.memory_space<vmem>>, vector<1x1x256xf32>
    %3 = vector.shape_cast %2 : vector<1x1x256xf32> to vector<1x256xf32>
    %c0_6 = arith.constant 0 : index
    %c0_7 = arith.constant 0 : index
    %c0_8 = arith.constant 0 : index
    %4 = vector.load %arg5[%c0_6, %c0_7, %c0_8] : memref<1x1x256xf32, #tpu.memory_space<vmem>>, vector<1x1x256xf32>
    %5 = vector.shape_cast %4 : vector<1x1x256xf32> to vector<1x256xf32>
    %6 = vector.broadcast %3 : vector<1x256xf32> to vector<8x256xf32>
    %7 = vector.broadcast %0 : vector<8x1xf32> to vector<8x256xf32>
    %8 = arith.mulf %6, %7 : vector<8x256xf32>
    %9 = vector.broadcast %1 : vector<8x1xf32> to vector<8x256xf32>
    %10 = arith.addf %8, %9 : vector<8x256xf32>
    %11 = math.sin %10 : vector<8x256xf32>
    %c0_9 = arith.constant 0 : index
    %c0_10 = arith.constant 0 : index
    %c0_11 = arith.constant 0 : index
    %c0_12 = arith.constant 0 : index
    %12 = vector.load %arg6[%c0_9, %c0_10, %c0_11, %c0_12] : memref<1x2x8x256xf32, #tpu.memory_space<vmem>>, vector<1x1x8x256xf32>
    %13 = vector.shape_cast %12 : vector<1x1x8x256xf32> to vector<8x256xf32>
    %14 = vector.shape_cast %11 : vector<8x256xf32> to vector<1x1x8x256xf32>
    tpu.vector_store %arg6[%c0_9, %c0_10, %c0_11, %c0_12], %14 {strides = array<i32>} : memref<1x2x8x256xf32, #tpu.memory_space<vmem>>, vector<1x1x8x256xf32>,
    %15 = vector.broadcast %5 : vector<1x256xf32> to vector<8x256xf32>
    %16 = vector.broadcast %0 : vector<8x1xf32> to vector<8x256xf32>
    %17 = arith.mulf %15, %16 : vector<8x256xf32>
    %18 = vector.broadcast %1 : vector<8x1xf32> to vector<8x256xf32>
    %19 = arith.addf %17, %18 : vector<8x256xf32>
    %20 = math.sin %19 : vector<8x256xf32>
    %c0_13 = arith.constant 0 : index
    %c1 = arith.constant 1 : index
    %c0_14 = arith.constant 0 : index
    %c0_15 = arith.constant 0 : index
    %21 = vector.load %arg6[%c0_13, %c1, %c0_14, %c0_15] : memref<1x2x8x256xf32, #tpu.memory_space<vmem>>, vector<1x1x8x256xf32>
    %22 = vector.shape_cast %21 : vector<1x1x8x256xf32> to vector<8x256xf32>
    %23 = vector.shape_cast %20 : vector<8x256xf32> to vector<1x1x8x256xf32>
    tpu.vector_store %arg6[%c0_13, %c1, %c0_14, %c0_15], %23 {strides = array<i32>} : memref<1x2x8x256xf32, #tpu.memory_space<vmem>>, vector<1x1x8x256xf32>,
    return
  }
  func.func @transform_0(%arg0: i32, %arg1: i32) -> (i32, i32) {
    %c0_i32 = arith.constant 0 : i32
    %c0_i32_0 = arith.constant 0 : i32
    return %arg1, %c0_i32 : i32, i32
  }
  func.func @transform_1(%arg0: i32, %arg1: i32) -> (i32, i32) {
    %c0_i32 = arith.constant 0 : i32
    %c0_i32_0 = arith.constant 0 : i32
    return %arg1, %c0_i32 : i32, i32
  }
  func.func @transform_2(%arg0: i32, %arg1: i32) -> (i32, i32, i32) {
    %c0_i32 = arith.constant 0 : i32
    %c0_i32_0 = arith.constant 0 : i32
    %c0_i32_1 = arith.constant 0 : i32
    return %arg0, %c0_i32, %c0_i32_0 : i32, i32, i32
  }
  func.func @transform_3(%arg0: i32, %arg1: i32) -> (i32, i32, i32) {
    %c0_i32 = arith.constant 0 : i32
    %c0_i32_0 = arith.constant 0 : i32
    %c0_i32_1 = arith.constant 0 : i32
    return %arg0, %c0_i32, %c0_i32_0 : i32, i32, i32
  }
  func.func @transform_4(%arg0: i32, %arg1: i32) -> (i32, i32, i32, i32) {
    %c0_i32 = arith.constant 0 : i32
    %c0_i32_0 = arith.constant 0 : i32
    %c0_i32_1 = arith.constant 0 : i32
    return %arg0, %c0_i32, %arg1, %c0_i32_0 : i32, i32, i32, i32
  }
}

</mosaic_0001>

<llo_original>
// kernel: tpu_custom_call.1
$region0: #{tpu_custom_call.1}
  #allocation0 [shape = 'u32[]', space=smem, size = 0x4, offset = 0x4, fixed_abs, tag = 'smem constant byte address 0x4 - core index']
  #allocation1 [shape = 'u32[144,128]{1,0:T(1,128)}', space=vmem, size = 0x12000, scoped, tag = 'internal scratch']
  %s0 = inlined_call_operand.vmem [shape: f32[8,1], index: 0, kind: input, shape index: {}]
  %s1 = inlined_call_operand.vmem [shape: f32[8,1], index: 1, kind: input, shape index: {}]
  %s2 = inlined_call_operand.vmem [shape: f32[2,1,256], index: 2, kind: input, shape index: {}]
  %s3 = inlined_call_operand.vmem [shape: f32[2,1,256], index: 3, kind: input, shape index: {}]
  %s4 = inlined_call_operand.hbm [shape: f32[2,2,8,256], index: 4, kind: output, shape index: {}]
  %s5 = sld [smem:[#allocation0]]
  $region49: #{tpu_custom_call.1} parent=0
    _
  %s7 = ssub.s32 1, %s5
  %s8 = scalar_select 0, %s7, %s5
  $region1: #{tpu_custom_call.1} parent=0
    #allocation2 [shape = 'u8[32768]{0}', space=vmem, size = 0x8000, scoped, tag = 'output window, operand 0']
    #allocation3 [shape = 's32[2]{0}', space=sflag, size = 0x8, scoped, tag = 'scoped memory for tpu_custom_call.1']
    %9 = vsyncpa [#allocation3], 0
    %s10 = scalar_lea.sflag [#allocation3], 1
    %11 = vsyncpa %s10, 0
    loop: start=0, step=1, limit=4
    $region2: #{tpu_custom_call.1} parent=1 // loop_pre_header
      _
    $region3: #{tpu_custom_call.1} parent=1 // loop_header
      %s13 = sphi 0, %s17
      %p14 = scmp.ge.s32.totalorder %s13, 4
      %s20 = sphi 0, %s32
      %s21 = sphi 0, %s28
      %s22 = sphi 0, %s20
      %s23 = sphi 0, %s21
      %s24 = sphi 0, %s22
      %s25 = sphi 0, %s23
      %s35 = sphi 0, %s37
      %s38 = sphi 0, %s35
      %s39 = sphi 0, %s38
      %s55 = sphi 0, %s39
      %s61 = sphi 0, %s63
      %s64 = sphi 0, %s61
      %s65 = sphi 0, %s64
      %s81 = sphi 0, %s65
      %s87 = sphi 0, %s89
      %s90 = sphi 0, %s87
      %s91 = sphi 0, %s90
      %s107 = sphi 0, %s91
      %s113 = sphi 0, %s115
      %s116 = sphi 0, %s113
      %s117 = sphi 0, %s116
      %s133 = sphi 0, %s117
      %s141 = sphi 0, %s143
      %s144 = sphi 0, %s141
      %s145 = sphi 0, %s144
      %s161 = sphi 0, %s145
    $region4: #{tpu_custom_call.1} parent=1 // loop_header_branch
      %16 = sbr.rel (%p14) target = $region8
    $region5: #{tpu_custom_call.1} parent=1 // loop_body
      %s18 = ssub.s32 %s13, 1
      %s19 = ssub.s32 %s13, 2
      %s26 = sadd.s32 1, %s21
      %p27 = scmp.ge.s32.totalorder %s26, 1
      %s28 = scalar_select %p27, 0, %s26
      %s29 = sadd.s32 1, %s20
      %s30 = scalar_select %p27, %s29, %s20
      %p31 = scmp.ge.s32.totalorder %s30, 2
      %s32 = scalar_select %p31, 0, %s30
      %s33 = ssub.s32 %s21, %s28
      %p34 = scmp.eq.s32.totalorder %s33, 0
      %s36 = sadd.s32 %s35, 1
      %s37 = scalar_select %p34, %s35, %s36
      %p40 = pneg %p34
      %p41 = scmp.eq.s32.totalorder %s13, 1
      %p42 = por %p40, %p41
      %p43 = scmp.ne.s32.totalorder %s35, %s38
      %p44 = scmp.eq.s32.totalorder %s13, 0
      %p45 = por %p43, %p44
      %p46 = scmp.ne.s32.totalorder %s35, %s38
      %p47 = scmp.eq.s32.totalorder %s18, 1
      %p48 = por %p46, %p47
      %p49 = scmp.ne.s32.totalorder %s38, %s39
      %p50 = scmp.eq.s32.totalorder %s18, 0
      %p51 = por %p49, %p50
      %p52 = scmp.ne.s32.totalorder %s38, %s39
      %p53 = scmp.eq.s32.totalorder %s19, 1
      %p54 = por %p52, %p53
      %p56 = scmp.ne.s32.totalorder %s39, %s55
      %p57 = scmp.eq.s32.totalorder %s19, 0
      %p58 = por %p56, %p57
      %s59 = ssub.s32 %s21, %s28
      %p60 = scmp.eq.s32.totalorder %s59, 0
      %s62 = sadd.s32 %s61, 1
      %s63 = scalar_select %p60, %s61, %s62
      %p66 = pneg %p60
      %p67 = scmp.eq.s32.totalorder %s13, 1
      %p68 = por %p66, %p67
      %p69 = scmp.ne.s32.totalorder %s61, %s64
      %p70 = scmp.eq.s32.totalorder %s13, 0
      %p71 = por %p69, %p70
      %p72 = scmp.ne.s32.totalorder %s61, %s64
      %p73 = scmp.eq.s32.totalorder %s18, 1
      %p74 = por %p72, %p73
      %p75 = scmp.ne.s32.totalorder %s64, %s65
      %p76 = scmp.eq.s32.totalorder %s18, 0
      %p77 = por %p75, %p76
      %p78 = scmp.ne.s32.totalorder %s64, %s65
      %p79 = scmp.eq.s32.totalorder %s19, 1
      %p80 = por %p78, %p79
      %p82 = scmp.ne.s32.totalorder %s65, %s81
      %p83 = scmp.eq.s32.totalorder %s19, 0
      %p84 = por %p82, %p83
      %s85 = ssub.s32 %s20, %s32
      %p86 = scmp.eq.s32.totalorder %s85, 0
      %s88 = sadd.s32 %s87, 1
      %s89 = scalar_select %p86, %s87, %s88
      %p92 = pneg %p86
      %p93 = scmp.eq.s32.totalorder %s13, 1
      %p94 = por %p92, %p93
      %p95 = scmp.ne.s32.totalorder %s87, %s90
      %p96 = scmp.eq.s32.totalorder %s13, 0
      %p97 = por %p95, %p96
      %p98 = scmp.ne.s32.totalorder %s87, %s90
      %p99 = scmp.eq.s32.totalorder %s18, 1
      %p100 = por %p98, %p99
      %p101 = scmp.ne.s32.totalorder %s90, %s91
      %p102 = scmp.eq.s32.totalorder %s18, 0
      %p103 = por %p101, %p102
      %p104 = scmp.ne.s32.totalorder %s90, %s91
      %p105 = scmp.eq.s32.totalorder %s19, 1
      %p106 = por %p104, %p105
      %p108 = scmp.ne.s32.totalorder %s91, %s107
      %p109 = scmp.eq.s32.totalorder %s19, 0
      %p110 = por %p108, %p109
      %s111 = ssub.s32 %s20, %s32
      %p112 = scmp.eq.s32.totalorder %s111, 0
      %s114 = sadd.s32 %s113, 1
      %s115 = scalar_select %p112, %s113, %s114
      %p118 = pneg %p112
      %p119 = scmp.eq.s32.totalorder %s13, 1
      %p120 = por %p118, %p119
      %p121 = scmp.ne.s32.totalorder %s113, %s116
      %p122 = scmp.eq.s32.totalorder %s13, 0
      %p123 = por %p121, %p122
      %p124 = scmp.ne.s32.totalorder %s113, %s116
      %p125 = scmp.eq.s32.totalorder %s18, 1
      %p126 = por %p124, %p125
      %p127 = scmp.ne.s32.totalorder %s116, %s117
      %p128 = scmp.eq.s32.totalorder %s18, 0
      %p129 = por %p127, %p128
      %p130 = scmp.ne.s32.totalorder %s116, %s117
      %p131 = scmp.eq.s32.totalorder %s19, 1
      %p132 = por %p130, %p131
      %p134 = scmp.ne.s32.totalorder %s117, %s133
      %p135 = scmp.eq.s32.totalorder %s19, 0
      %p136 = por %p134, %p135
      %s137 = ssub.s32 %s20, %s32
      %s138 = ssub.s32 %s21, %s28
      %s139 = sor.u32 %s137, %s138
      %p140 = scmp.eq.s32.totalorder %s139, 0
      %s142 = sadd.s32 %s141, 1
      %s143 = scalar_select %p140, %s141, %s142
      %p146 = pneg %p140
      %p147 = scmp.eq.s32.totalorder %s13, 1
      %p148 = por %p146, %p147
      %p149 = scmp.ne.s32.totalorder %s141, %s144
      %p150 = scmp.eq.s32.totalorder %s13, 0
      %p151 = por %p149, %p150
      %p152 = scmp.ne.s32.totalorder %s141, %s144
      %p153 = scmp.eq.s32.totalorder %s18, 1
      %p154 = por %p152, %p153
      %p155 = scmp.ne.s32.totalorder %s144, %s145
      %p156 = scmp.eq.s32.totalorder %s18, 0
      %p157 = por %p155, %p156
      %p158 = scmp.ne.s32.totalorder %s144, %s145
      %p159 = scmp.eq.s32.totalorder %s19, 1
      %p160 = por %p158, %p159
      %p162 = scmp.ne.s32.totalorder %s145, %s161
      %p163 = scmp.eq.s32.totalorder %s19, 0
      %p164 = por %p162, %p163
      %p165 = scmp.le.s32.totalorder 1, %s13
      %p166 = scmp.lt.s32.totalorder %s13, 3
      %p167 = pnand %p165, %p166
      %p168 = pneg %p167
      // Predicated region
      $region9: #{tpu_custom_call.1} parent=5 // pred_check
        _
      $region10: #{tpu_custom_call.1} parent=5 // pred_check_branch
        %170 = sbr.rel (%p167) target = $region12
      $region11: #{tpu_custom_call.1} parent=5 // pred_region
        %s171 = ssub.s32 %s13, 1
        // Predicated region
        $region13: #{tpu_custom_call.1} parent=11 // pred_check
          %p172 = pneg %p51
        $region14: #{tpu_custom_call.1} parent=11 // pred_check_branch
          %174 = sbr.rel (%p172) target = $region16
        $region15: #{tpu_custom_call.1} parent=11 // pred_region
          %p175 = scmp.lt.s32.totalorder %s23, 0
          %s176 = scalar_select %p175, %s23, 0
          %s177 = smul.addr %s176, 8
          %s178 = scalar_lea.vmem %s0, %s177
        $region16: #{tpu_custom_call.1} parent=11 // pred_fallthru
          _
        // Predicated region
        $region17: #{tpu_custom_call.1} parent=11 // pred_check
          %p179 = pneg %p77
        $region18: #{tpu_custom_call.1} parent=11 // pred_check_branch
          %181 = sbr.rel (%p179) target = $region20
        $region19: #{tpu_custom_call.1} parent=11 // pred_region
          %p182 = scmp.lt.s32.totalorder %s23, 0
          %s183 = scalar_select %p182, %s23, 0
          %s184 = smul.addr %s183, 8
          %s185 = scalar_lea.vmem %s1, %s184
        $region20: #{tpu_custom_call.1} parent=11 // pred_fallthru
          _
      $region12: #{tpu_custom_call.1} parent=5 // pred_fallthru
        _
      %p186 = scmp.lt.s32.totalorder %s13, 2
      // Predicated region
      $region21: #{tpu_custom_call.1} parent=5 // pred_check
        %p187 = pneg %p186
      $region22: #{tpu_custom_call.1} parent=5 // pred_check_branch
        %189 = sbr.rel (%p187) target = $region24
      $region23: #{tpu_custom_call.1} parent=5 // pred_region
        // Predicated region
        $region25: #{tpu_custom_call.1} parent=23 // pred_check
          %p190 = pneg %p97
        $region26: #{tpu_custom_call.1} parent=23 // pred_check_branch
          %192 = sbr.rel (%p190) target = $region28
        $region27: #{tpu_custom_call.1} parent=23 // pred_region
          %p193 = scmp.lt.s32.totalorder %s20, 1
          %s194 = scalar_select %p193, %s20, 1
          %s195 = smul.addr %s194, 2
          %s196 = scalar_lea.vmem %s2, %s195
        $region28: #{tpu_custom_call.1} parent=23 // pred_fallthru
          _
        // Predicated region
        $region29: #{tpu_custom_call.1} parent=23 // pred_check
          %p197 = pneg %p123
        $region30: #{tpu_custom_call.1} parent=23 // pred_check_branch
          %199 = sbr.rel (%p197) target = $region32
        $region31: #{tpu_custom_call.1} parent=23 // pred_region
          %p200 = scmp.lt.s32.totalorder %s20, 1
          %s201 = scalar_select %p200, %s20, 1
          %s202 = smul.addr %s201, 2
          %s203 = scalar_lea.vmem %s3, %s202
        $region32: #{tpu_custom_call.1} parent=23 // pred_fallthru
          _
      $region24: #{tpu_custom_call.1} parent=5 // pred_fallthru
        _
      %p204 = scmp.le.s32.totalorder 1, %s13
      %p205 = scmp.lt.s32.totalorder %s13, 3
      %p206 = pnand %p204, %p205
      %p207 = pneg %p206
      // Predicated region
      $region33: #{tpu_custom_call.1} parent=5 // pred_check
        _
      $region34: #{tpu_custom_call.1} parent=5 // pred_check_branch
        %209 = sbr.rel (%p206) target = $region36
      $region35: #{tpu_custom_call.1} parent=5 // pred_region
        %s210 = ssub.s32 %s13, 1
        %p211 = scmp.lt.s32.totalorder %s23, 0
        %s212 = scalar_select %p211, %s23, 0
        %s213 = smul.addr %s212, 8
        %s214 = scalar_lea.vmem %s0, %s213
        %p215 = pneg %p51
        %p216 = pneg %p48
        %p217 = scmp.lt.s32.totalorder %s23, 0
        %s218 = scalar_select %p217, %s23, 0
        %s219 = smul.addr %s218, 8
        %s220 = scalar_lea.vmem %s1, %s219
        %p221 = pneg %p77
        %p222 = pneg %p74
        %p223 = scmp.lt.s32.totalorder %s22, 1
        %s224 = scalar_select %p223, %s22, 1
        %s225 = smul.addr %s224, 2
        %s226 = scalar_lea.vmem %s2, %s225
        %p227 = pneg %p103
        %p228 = pneg %p100
        %p229 = scmp.lt.s32.totalorder %s22, 1
        %s230 = scalar_select %p229, %s22, 1
        %s231 = smul.addr %s230, 2
        %s232 = scalar_lea.vmem %s3, %s231
        %p233 = pneg %p129
        %p234 = pneg %p126
        %p235 = pneg %p157
        %p236 = pneg %p154
        %s237 = sand.u32 %s144, 1
        %s238 = scalar_lea.sflag [#allocation3], %s237
        %s239 = sand.u32 %s144, 1
        %s240 = smul.addr %s239, 32
        %s241 = scalar_lea.vmem [#allocation2], %s240
        %p242 = scmp.lt.s32.totalorder %s23, 0
        %s243 = scalar_select %p242, %s23, 0
        %s244 = smul.addr %s243, 8
        %s245 = scalar_lea.vmem %s0, %s244
        %p246 = scmp.lt.s32.totalorder %s23, 0
        %s247 = scalar_select %p246, %s23, 0
        %s248 = smul.addr %s247, 8
        %s249 = scalar_lea.vmem %s1, %s248
        %p250 = scmp.lt.s32.totalorder %s22, 1
        %s251 = scalar_select %p250, %s22, 1
        %s252 = smul.addr %s251, 2
        %s253 = scalar_lea.vmem %s2, %s252
        %p254 = scmp.lt.s32.totalorder %s22, 1
        %s255 = scalar_select %p254, %s22, 1
        %s256 = smul.addr %s255, 2
        %s257 = scalar_lea.vmem %s3, %s256
        %v258 = vld [vmem:[%s245] sm:$0xff]
        %v259 = vld [vmem:[%s249] sm:$0xff]
        %v260 = vld [vmem:[%s253] sm:$0x3]
        %v261 = vld [vmem:[%s257] sm:$0x3]
        %v263 = vlaneseq
        %v264 = vshrl.u32 %v263, 7
        %v265 = vsub.s32 0, %v264
        %v266 = vrot.slane %v260, %v265
        %v267 = vlaneseq
        %v268 = vshrl.u32 %v267, 7
        %v269 = vsub.s32 1, %v268
        %v270 = vrot.slane %v260, %v269
        %274 = vset.pattern.permute.xlu0 0
        %275 = vperm.xlu0 %274, %v258
        %v276 = vpop.permute.xlu0 %275
        %v278 = vmul.f32 %v266, %v276
        %v279 = vmul.f32 %v270, %v276
        %281 = vset.pattern.permute.xlu0 0
        %282 = vperm.xlu0 %281, %v259
        %v283 = vpop.permute.xlu0 %282
        %v285 = vadd.f32 %v278, %v283
        %v286 = vadd.f32 %v279, %v283
        %v287 = vand.u32 2147483647, %v285
        %vm288 = vcmp.le.f32.partialorder %v287, 0.7853982
        %vm289 = vcmp.lt.s32.totalorder %v285, 0
        %v290 = vand.u32 %v285, 2139095040
        %v291 = vshrl.u32 %v290, 23
        %v292 = vsub.s32 %v291, 127
        %v293 = vand.u32 2147483647, %v285
        %v294 = vand.u32 %v293, 8388607
        %v295 = vor.u32 %v294, 8388608
        %v296 = vsub.s32 0, %v295
        %v297 = vadd.s32 %v292, 1
        %vm298 = vcmp.gt.s32.totalorder %v297, 0
        %v299 = vsel %vm298, %v297, 0
        %v300 = vshrl.u32 %v299, 5
        %v301 = vand.u32 %v299, 31
        %v302 = vsub.s32 32, %v301
        %v303 = vshrl.u32 683565275, %v302
        %v304 = vshll.u32 683565275, %v301
        %v305 = vshrl.u32 2475754826, %v302
        %v306 = vor.u32 %v304, %v305
        %v307 = vshll.u32 2475754826, %v301
        %v308 = vshrl.u32 2131351028, %v302
        %v309 = vor.u32 %v307, %v308
        %v310 = vshll.u32 2131351028, %v301
        %v311 = vshrl.u32 2102212464, %v302
        %v312 = vor.u32 %v310, %v311
        %v313 = vshll.u32 2102212464, %v301
        %v314 = vshrl.u32 920167782, %v302
        %v315 = vor.u32 %v313, %v314
        %v316 = vshll.u32 920167782, %v301
        %v317 = vshrl.u32 1326507024, %v302
        %v318 = vor.u32 %v316, %v317
        %vm319 = vcmp.lt.s32.totalorder %v300, 1
        %vm320 = vcmp.lt.s32.totalorder %v300, 2
        %vm321 = vcmp.lt.s32.totalorder %v300, 3
        %vm322 = vcmp.lt.s32.totalorder %v300, 4
        %v323 = vsel %vm319, %v303, %v306
        %v324 = vsel %vm322, %v312, 2102212464
        %v325 = vsel %vm321, %v309, %v324
        %v326 = vsel %vm320, %v323, %v325
        %v327 = vsel %vm319, %v306, %v309
        %v328 = vsel %vm322, %v315, 920167782
        %v329 = vsel %vm321, %v312, %v328
        %v330 = vsel %vm320, %v327, %v329
        %v331 = vsel %vm319, %v309, %v312
        %v332 = vsel %vm322, %v318, 1326507024
        %v333 = vsel %vm321, %v315, %v332
        %v334 = vsel %vm320, %v331, %v333
        %v335 = vshll.u32 %v295, 8
        %v336 = vmul.u32.u64.compose %v335, %v334
        %v337 = vextract.low.u32 %v336
        %v338 = vextract.high.u32 %v336
        %v339 = vmul.u32.u64.compose %v335, %v330
        %v340 = vextract.low.u32 %v339
        %v341 = vextract.high.u32 %v339
        %v342 = vmul.u32 %v335, %v326
        %v343 = vadd.s32 %v338, %v340
        %vm344 = vc.u32 %v338, %v340
        %v345 = vadd.s32 %v341, 1
        %v346 = vsel %vm344, %v345, %v341
        %v347 = vadd.s32 %v342, %v346
        %v348 = vadd.s32 %v347, 536870912
        %v349 = vshrl.u32 %v348, 30
        %v350 = vshll.u32 %v349, 30
        %v351 = vsub.s32 %v347, %v350
        %vm352 = vcmp.lt.s32.totalorder %v351, 0
        %v353 = vsub.s32 0, %v351
        %v354 = vsel %vm352, %v353, %v351
        %v355 = vclz %v354
        %v356 = vsub.s32 %v355, 2
        %vm357 = vcmp.gt.s32.totalorder 0, %v356
        %v358 = vsel %vm357, 0, %v356
        %v359 = vsub.s32 32, %v358
        %v360 = vshll.u32 %v351, %v358
        %v361 = vshrl.u32 %v343, %v359
        %v362 = vor.u32 %v360, %v361
        %v363 = vsub.s32 4294967266, %v358
        %v364 = vadd.s32 %v363, 127
        %v365 = vshll.u32 %v364, 23
        %v366 = vor.u32 4788187, %v365
        %v367 = vand.u32 2147483647, %v366
        %v369 = vcvt.s32.f32 %v362
        %v370 = vmul.f32 %v369, %v367
        %v371 = vxor.u32 %v370, 2147483648
        %v372 = vsel %vm289, %v371, %v370
        %v373 = vsub.s32 4, %v349
        %v374 = vsel %vm289, %v373, %v349
        %v375 = vsel %vm288, %v285, %v372
        %v376 = vsel %vm288, 0, %v374
        %v377 = vcosq.f32.pop %v375
        %v378 = vsinq.f32.pop %v375
        %vm379 = vweird.f32 %v285
        %v380 = vadd.s32 %v376, 3
        %v381 = vand.u32 %v380, 3
        %vm382 = vcmp.lt.s32.totalorder %v381, 2
        %vm383 = vcmp.eq.s32.totalorder %v381, 0
        %v384 = vxor.u32 %v378, 2147483648
        %v385 = vsel %vm383, %v377, %v384
        %vm386 = vcmp.eq.s32.totalorder %v381, 2
        %v387 = vxor.u32 %v377, 2147483648
        %v388 = vsel %vm386, %v387, %v378
        %v389 = vsel %vm382, %v385, %v388
        %v390 = vsel %vm379, nan, %v389
        %v391 = vand.u32 2147483647, %v286
        %vm392 = vcmp.le.f32.partialorder %v391, 0.7853982
        %vm393 = vcmp.lt.s32.totalorder %v286, 0
        %v394 = vand.u32 %v286, 2139095040
        %v395 = vshrl.u32 %v394, 23
        %v396 = vsub.s32 %v395, 127
        %v397 = vand.u32 2147483647, %v286
        %v398 = vand.u32 %v397, 8388607
        %v399 = vor.u32 %v398, 8388608
        %v400 = vsub.s32 0, %v399
        %v401 = vadd.s32 %v396, 1
        %vm402 = vcmp.gt.s32.totalorder %v401, 0
        %v403 = vsel %vm402, %v401, 0
        %v404 = vshrl.u32 %v403, 5
        %v405 = vand.u32 %v403, 31
        %v406 = vsub.s32 32, %v405
        %v407 = vshrl.u32 683565275, %v406
        %v408 = vshll.u32 683565275, %v405
        %v409 = vshrl.u32 2475754826, %v406
        %v410 = vor.u32 %v408, %v409
        %v411 = vshll.u32 2475754826, %v405
        %v412 = vshrl.u32 2131351028, %v406
        %v413 = vor.u32 %v411, %v412
        %v414 = vshll.u32 2131351028, %v405
        %v415 = vshrl.u32 2102212464, %v406
        %v416 = vor.u32 %v414, %v415
        %v417 = vshll.u32 2102212464, %v405
        %v418 = vshrl.u32 920167782, %v406
        %v419 = vor.u32 %v417, %v418
        %v420 = vshll.u32 920167782, %v405
        %v421 = vshrl.u32 1326507024, %v406
        %v422 = vor.u32 %v420, %v421
        %vm423 = vcmp.lt.s32.totalorder %v404, 1
        %vm424 = vcmp.lt.s32.totalorder %v404, 2
        %vm425 = vcmp.lt.s32.totalorder %v404, 3
        %vm426 = vcmp.lt.s32.totalorder %v404, 4
        %v427 = vsel %vm423, %v407, %v410
        %v428 = vsel %vm426, %v416, 2102212464
        %v429 = vsel %vm425, %v413, %v428
        %v430 = vsel %vm424, %v427, %v429
        %v431 = vsel %vm423, %v410, %v413
        %v432 = vsel %vm426, %v419, 920167782
        %v433 = vsel %vm425, %v416, %v432
        %v434 = vsel %vm424, %v431, %v433
        %v435 = vsel %vm423, %v413, %v416
        %v436 = vsel %vm426, %v422, 1326507024
        %v437 = vsel %vm425, %v419, %v436
        %v438 = vsel %vm424, %v435, %v437
        %v439 = vshll.u32 %v399, 8
        %v440 = vmul.u32.u64.compose %v439, %v438
        %v441 = vextract.low.u32 %v440
        %v442 = vextract.high.u32 %v440
        %v443 = vmul.u32.u64.compose %v439, %v434
        %v444 = vextract.low.u32 %v443
        %v445 = vextract.high.u32 %v443
        %v446 = vmul.u32 %v439, %v430
        %v447 = vadd.s32 %v442, %v444
        %vm448 = vc.u32 %v442, %v444
        %v449 = vadd.s32 %v445, 1
        %v450 = vsel %vm448, %v449, %v445
        %v451 = vadd.s32 %v446, %v450
        %v452 = vadd.s32 %v451, 536870912
        %v453 = vshrl.u32 %v452, 30
        %v454 = vshll.u32 %v453, 30
        %v455 = vsub.s32 %v451, %v454
        %vm456 = vcmp.lt.s32.totalorder %v455, 0
        %v457 = vsub.s32 0, %v455
        %v458 = vsel %vm456, %v457, %v455
        %v459 = vclz %v458
        %v460 = vsub.s32 %v459, 2
        %vm461 = vcmp.gt.s32.totalorder 0, %v460
        %v462 = vsel %vm461, 0, %v460
        %v463 = vsub.s32 32, %v462
        %v464 = vshll.u32 %v455, %v462
        %v465 = vshrl.u32 %v447, %v463
        %v466 = vor.u32 %v464, %v465
        %v467 = vsub.s32 4294967266, %v462
        %v468 = vadd.s32 %v467, 127
        %v469 = vshll.u32 %v468, 23
        %v470 = vor.u32 4788187, %v469
        %v471 = vand.u32 2147483647, %v470
        %v473 = vcvt.s32.f32 %v466
        %v474 = vmul.f32 %v473, %v471
        %v475 = vxor.u32 %v474, 2147483648
        %v476 = vsel %vm393, %v475, %v474
        %v477 = vsub.s32 4, %v453
        %v478 = vsel %vm393, %v477, %v453
        %v479 = vsel %vm392, %v286, %v476
        %v480 = vsel %vm392, 0, %v478
        %v481 = vcosq.f32.pop %v479
        %v482 = vsinq.f32.pop %v479
        %vm483 = vweird.f32 %v286
        %v484 = vadd.s32 %v480, 3
        %v485 = vand.u32 %v484, 3
        %vm486 = vcmp.lt.s32.totalorder %v485, 2
        %vm487 = vcmp.eq.s32.totalorder %v485, 0
        %v488 = vxor.u32 %v482, 2147483648
        %v489 = vsel %vm487, %v481, %v488
        %vm490 = vcmp.eq.s32.totalorder %v485, 2
        %v491 = vxor.u32 %v481, 2147483648
        %v492 = vsel %vm490, %v491, %v482
        %v493 = vsel %vm486, %v489, %v492
        %v494 = vsel %vm483, nan, %v493
        %495 = vst [vmem:[%s241] sm:$0xff] %v390
        %496 = vst [vmem:[%s241 + $0x8] sm:$0xff] %v494
        %v498 = vlaneseq
        %v499 = vshrl.u32 %v498, 7
        %v500 = vsub.s32 0, %v499
        %v501 = vrot.slane %v261, %v500
        %v502 = vlaneseq
        %v503 = vshrl.u32 %v502, 7
        %v504 = vsub.s32 1, %v503
        %v505 = vrot.slane %v261, %v504
        %v508 = vmul.f32 %v501, %v276
        %v509 = vmul.f32 %v505, %v276
        %v510 = vadd.f32 %v508, %v283
        %v511 = vadd.f32 %v509, %v283
        %v512 = vand.u32 2147483647, %v510
        %vm513 = vcmp.le.f32.partialorder %v512, 0.7853982
        %vm514 = vcmp.lt.s32.totalorder %v510, 0
        %v515 = vand.u32 %v510, 2139095040
        %v516 = vshrl.u32 %v515, 23
        %v517 = vsub.s32 %v516, 127
        %v518 = vand.u32 2147483647, %v510
        %v519 = vand.u32 %v518, 8388607
        %v520 = vor.u32 %v519, 8388608
        %v521 = vsub.s32 0, %v520
        %v522 = vadd.s32 %v517, 1
        %vm523 = vcmp.gt.s32.totalorder %v522, 0
        %v524 = vsel %vm523, %v522, 0
        %v525 = vshrl.u32 %v524, 5
        %v526 = vand.u32 %v524, 31
        %v527 = vsub.s32 32, %v526
        %v528 = vshrl.u32 683565275, %v527
        %v529 = vshll.u32 683565275, %v526
        %v530 = vshrl.u32 2475754826, %v527
        %v531 = vor.u32 %v529, %v530
        %v532 = vshll.u32 2475754826, %v526
        %v533 = vshrl.u32 2131351028, %v527
        %v534 = vor.u32 %v532, %v533
        %v535 = vshll.u32 2131351028, %v526
        %v536 = vshrl.u32 2102212464, %v527
        %v537 = vor.u32 %v535, %v536
        %v538 = vshll.u32 2102212464, %v526
        %v539 = vshrl.u32 920167782, %v527
        %v540 = vor.u32 %v538, %v539
        %v541 = vshll.u32 920167782, %v526
        %v542 = vshrl.u32 1326507024, %v527
        %v543 = vor.u32 %v541, %v542
        %vm544 = vcmp.lt.s32.totalorder %v525, 1
        %vm545 = vcmp.lt.s32.totalorder %v525, 2
        %vm546 = vcmp.lt.s32.totalorder %v525, 3
        %vm547 = vcmp.lt.s32.totalorder %v525, 4
        %v548 = vsel %vm544, %v528, %v531
        %v549 = vsel %vm547, %v537, 2102212464
        %v550 = vsel %vm546, %v534, %v549
        %v551 = vsel %vm545, %v548, %v550
        %v552 = vsel %vm544, %v531, %v534
        %v553 = vsel %vm547, %v540, 920167782
        %v554 = vsel %vm546, %v537, %v553
        %v555 = vsel %vm545, %v552, %v554
        %v556 = vsel %vm544, %v534, %v537
        %v557 = vsel %vm547, %v543, 1326507024
        %v558 = vsel %vm546, %v540, %v557
        %v559 = vsel %vm545, %v556, %v558
        %v560 = vshll.u32 %v520, 8
        %v561 = vmul.u32.u64.compose %v560, %v559
        %v562 = vextract.low.u32 %v561
        %v563 = vextract.high.u32 %v561
        %v564 = vmul.u32.u64.compose %v560, %v555
        %v565 = vextract.low.u32 %v564
        %v566 = vextract.high.u32 %v564
        %v567 = vmul.u32 %v560, %v551
        %v568 = vadd.s32 %v563, %v565
        %vm569 = vc.u32 %v563, %v565
        %v570 = vadd.s32 %v566, 1
        %v571 = vsel %vm569, %v570, %v566
        %v572 = vadd.s32 %v567, %v571
        %v573 = vadd.s32 %v572, 536870912
        %v574 = vshrl.u32 %v573, 30
        %v575 = vshll.u32 %v574, 30
        %v576 = vsub.s32 %v572, %v575
        %vm577 = vcmp.lt.s32.totalorder %v576, 0
        %v578 = vsub.s32 0, %v576
        %v579 = vsel %vm577, %v578, %v576
        %v580 = vclz %v579
        %v581 = vsub.s32 %v580, 2
        %vm582 = vcmp.gt.s32.totalorder 0, %v581
        %v583 = vsel %vm582, 0, %v581
        %v584 = vsub.s32 32, %v583
        %v585 = vshll.u32 %v576, %v583
        %v586 = vshrl.u32 %v568, %v584
        %v587 = vor.u32 %v585, %v586
        %v588 = vsub.s32 4294967266, %v583
        %v589 = vadd.s32 %v588, 127
        %v590 = vshll.u32 %v589, 23
        %v591 = vor.u32 4788187, %v590
        %v592 = vand.u32 2147483647, %v591
        %v594 = vcvt.s32.f32 %v587
        %v595 = vmul.f32 %v594, %v592
        %v596 = vxor.u32 %v595, 2147483648
        %v597 = vsel %vm514, %v596, %v595
        %v598 = vsub.s32 4, %v574
        %v599 = vsel %vm514, %v598, %v574
        %v600 = vsel %vm513, %v510, %v597
        %v601 = vsel %vm513, 0, %v599
        %v602 = vcosq.f32.pop %v600
        %v603 = vsinq.f32.pop %v600
        %vm604 = vweird.f32 %v510
        %v605 = vadd.s32 %v601, 3
        %v606 = vand.u32 %v605, 3
        %vm607 = vcmp.lt.s32.totalorder %v606, 2
        %vm608 = vcmp.eq.s32.totalorder %v606, 0
        %v609 = vxor.u32 %v603, 2147483648
        %v610 = vsel %vm608, %v602, %v609
        %vm611 = vcmp.eq.s32.totalorder %v606, 2
        %v612 = vxor.u32 %v602, 2147483648
        %v613 = vsel %vm611, %v612, %v603
        %v614 = vsel %vm607, %v610, %v613
        %v615 = vsel %vm604, nan, %v614
        %v616 = vand.u32 2147483647, %v511
        %vm617 = vcmp.le.f32.partialorder %v616, 0.7853982
        %vm618 = vcmp.lt.s32.totalorder %v511, 0
        %v619 = vand.u32 %v511, 2139095040
        %v620 = vshrl.u32 %v619, 23
        %v621 = vsub.s32 %v620, 127
        %v622 = vand.u32 2147483647, %v511
        %v623 = vand.u32 %v622, 8388607
        %v624 = vor.u32 %v623, 8388608
        %v625 = vsub.s32 0, %v624
        %v626 = vadd.s32 %v621, 1
        %vm627 = vcmp.gt.s32.totalorder %v626, 0
        %v628 = vsel %vm627, %v626, 0
        %v629 = vshrl.u32 %v628, 5
        %v630 = vand.u32 %v628, 31
        %v631 = vsub.s32 32, %v630
        %v632 = vshrl.u32 683565275, %v631
        %v633 = vshll.u32 683565275, %v630
        %v634 = vshrl.u32 2475754826, %v631
        %v635 = vor.u32 %v633, %v634
        %v636 = vshll.u32 2475754826, %v630
        %v637 = vshrl.u32 2131351028, %v631
        %v638 = vor.u32 %v636, %v637
        %v639 = vshll.u32 2131351028, %v630
        %v640 = vshrl.u32 2102212464, %v631
        %v641 = vor.u32 %v639, %v640
        %v642 = vshll.u32 2102212464, %v630
        %v643 = vshrl.u32 920167782, %v631
        %v644 = vor.u32 %v642, %v643
        %v645 = vshll.u32 920167782, %v630
        %v646 = vshrl.u32 1326507024, %v631
        %v647 = vor.u32 %v645, %v646
        %vm648 = vcmp.lt.s32.totalorder %v629, 1
        %vm649 = vcmp.lt.s32.totalorder %v629, 2
        %vm650 = vcmp.lt.s32.totalorder %v629, 3
        %vm651 = vcmp.lt.s32.totalorder %v629, 4
        %v652 = vsel %vm648, %v632, %v635
        %v653 = vsel %vm651, %v641, 2102212464
        %v654 = vsel %vm650, %v638, %v653
        %v655 = vsel %vm649, %v652, %v654
        %v656 = vsel %vm648, %v635, %v638
        %v657 = vsel %vm651, %v644, 920167782
        %v658 = vsel %vm650, %v641, %v657
        %v659 = vsel %vm649, %v656, %v658
        %v660 = vsel %vm648, %v638, %v641
        %v661 = vsel %vm651, %v647, 1326507024
        %v662 = vsel %vm650, %v644, %v661
        %v663 = vsel %vm649, %v660, %v662
        %v664 = vshll.u32 %v624, 8
        %v665 = vmul.u32.u64.compose %v664, %v663
        %v666 = vextract.low.u32 %v665
        %v667 = vextract.high.u32 %v665
        %v668 = vmul.u32.u64.compose %v664, %v659
        %v669 = vextract.low.u32 %v668
        %v670 = vextract.high.u32 %v668
        %v671 = vmul.u32 %v664, %v655
        %v672 = vadd.s32 %v667, %v669
        %vm673 = vc.u32 %v667, %v669
        %v674 = vadd.s32 %v670, 1
        %v675 = vsel %vm673, %v674, %v670
        %v676 = vadd.s32 %v671, %v675
        %v677 = vadd.s32 %v676, 536870912
        %v678 = vshrl.u32 %v677, 30
        %v679 = vshll.u32 %v678, 30
        %v680 = vsub.s32 %v676, %v679
        %vm681 = vcmp.lt.s32.totalorder %v680, 0
        %v682 = vsub.s32 0, %v680
        %v683 = vsel %vm681, %v682, %v680
        %v684 = vclz %v683
        %v685 = vsub.s32 %v684, 2
        %vm686 = vcmp.gt.s32.totalorder 0, %v685
        %v687 = vsel %vm686, 0, %v685
        %v688 = vsub.s32 32, %v687
        %v689 = vshll.u32 %v680, %v687
        %v690 = vshrl.u32 %v672, %v688
        %v691 = vor.u32 %v689, %v690
        %v692 = vsub.s32 4294967266, %v687
        %v693 = vadd.s32 %v692, 127
        %v694 = vshll.u32 %v693, 23
        %v695 = vor.u32 4788187, %v694
        %v696 = vand.u32 2147483647, %v695
        %v698 = vcvt.s32.f32 %v691
        %v699 = vmul.f32 %v698, %v696
        %v700 = vxor.u32 %v699, 2147483648
        %v701 = vsel %vm618, %v700, %v699
        %v702 = vsub.s32 4, %v678
        %v703 = vsel %vm618, %v702, %v678
        %v704 = vsel %vm617, %v511, %v701
        %v705 = vsel %vm617, 0, %v703
        %v706 = vcosq.f32.pop %v704
        %v707 = vsinq.f32.pop %v704
        %vm708 = vweird.f32 %v511
        %v709 = vadd.s32 %v705, 3
        %v710 = vand.u32 %v709, 3
        %vm711 = vcmp.lt.s32.totalorder %v710, 2
        %vm712 = vcmp.eq.s32.totalorder %v710, 0
        %v713 = vxor.u32 %v707, 2147483648
        %v714 = vsel %vm712, %v706, %v713
        %vm715 = vcmp.eq.s32.totalorder %v710, 2
        %v716 = vxor.u32 %v706, 2147483648
        %v717 = vsel %vm715, %v716, %v707
        %v718 = vsel %vm711, %v714, %v717
        %v719 = vsel %vm708, nan, %v718
        %s720 = scalar_lea.vmem %s241, 16 [#allocation2]
        %721 = vst [vmem:[%s720] sm:$0xff] %v615
        %722 = vst [vmem:[%s720 + $0x8] sm:$0xff] %v719
        %s723 = sand.u32 %s144, 1
        %s724 = scalar_lea.sflag [#allocation3], %s723
        %s725 = sand.u32 %s144, 1
        %s726 = smul.addr %s725, 32
        %s727 = scalar_lea.vmem [#allocation2], %s726
        // Predicated region
        $region37: #{tpu_custom_call.1} parent=35 // pred_check
          %p728 = pneg %p154
        $region38: #{tpu_custom_call.1} parent=35 // pred_check_branch
          %730 = sbr.rel (%p728) target = $region40
        $region39: #{tpu_custom_call.1} parent=35 // pred_region
          %s732 = ssub.s32 512, 512
          %733 = vsyncadd %s724, %s732
          %s734 = smul.addr %s23, 2
          %s735 = smul.addr %s22, 4
          %s736 = sadd.s32 %s734, %s735
          %s737 = smul.addr %s736, 128
          %s738 = scalar_lea.hbm %s4, %s737
          %s739 = sshll.u32 %s727, 4
          %s740 = int_to_ptr.vmem [resolvable:$true] %s739
          %745 = dma.vmem_to_hbm [thread:$0]  %s740, 512, %s738, %s724, 256, 256, 16
        $region40: #{tpu_custom_call.1} parent=35 // pred_fallthru
          _
      $region36: #{tpu_custom_call.1} parent=5 // pred_fallthru
        _
      %p746 = scmp.le.s32.totalorder 2, %s13
      // Predicated region
      $region41: #{tpu_custom_call.1} parent=5 // pred_check
        %p747 = pneg %p746
      $region42: #{tpu_custom_call.1} parent=5 // pred_check_branch
        %749 = sbr.rel (%p747) target = $region44
      $region43: #{tpu_custom_call.1} parent=5 // pred_region
        %s750 = ssub.s32 %s13, 2
        // Predicated region
        $region45: #{tpu_custom_call.1} parent=43 // pred_check
          %p751 = pneg %p160
        $region46: #{tpu_custom_call.1} parent=43 // pred_check_branch
          %753 = sbr.rel (%p751) target = $region48
        $region47: #{tpu_custom_call.1} parent=43 // pred_region
          %s754 = sand.u32 %s145, 1
          %s755 = scalar_lea.sflag [#allocation3], %s754
          %s756 = sand.u32 %s145, 1
          %s757 = smul.addr %s756, 32
          %s758 = scalar_lea.vmem [#allocation2], %s757
          %759 = dma.done %s755, 512
        $region48: #{tpu_custom_call.1} parent=43 // pred_fallthru
          _
      $region44: #{tpu_custom_call.1} parent=5 // pred_fallthru
        _
    $region6: #{tpu_custom_call.1} parent=1 // loop_footer
      %s17 = sadd.s32 1, %s13
    $region7: #{tpu_custom_call.1} parent=1 // loop_footer_branch
      %12 = sbr.rel target = $region3
    $region8: #{tpu_custom_call.1} parent=1 // loop_exit
      _
    %760 = vsyncpa [#allocation3], 1
    %s761 = scalar_lea.sflag [#allocation3], 1
    %762 = vsyncpa %s761, 1

</llo_original>
